<compile_context>
chip_gen: v5e
topology: v5e:2x2
jax: 0.10.0
libtpu: 0.0.40
codegen_flags: <defaults>
</compile_context>

<pallas_src>
import functools

import jax
import jax.numpy as jnp
from jax.experimental import pallas as pl
from jax.experimental.pallas import tpu as pltpu


def _round_up(x, m):
    return (x + m - 1) // m * m


# ----------------------------------------------------------------------------
# Fused linear kernel: o = x @ w + b, K-reduction over grid axis 2.
# ----------------------------------------------------------------------------
def _linear_kernel(x_ref, w_ref, b_ref, o_ref, acc_ref, *, n_k, mxu_dtype):
    k = pl.program_id(2)

    @pl.when(k == 0)
    def _():
        acc_ref[...] = jnp.zeros_like(acc_ref)

    acc_ref[...] += jnp.dot(
        x_ref[...].astype(mxu_dtype),
        w_ref[...].astype(mxu_dtype),
        preferred_element_type=jnp.float32,
    )

    @pl.when(k == n_k - 1)
    def _():
        # Bias add in f32 on the accumulator (lane-dense unmasked store).
        o_ref[...] = (acc_ref[...] + b_ref[...]).astype(o_ref.dtype)


# ----------------------------------------------------------------------------
# Embedding forward: y = x @ weight.T + bias  (PyTorch nn.Linear semantics).
#   weight: (dim_model, vocabulary_size)   -- PyTorch layout
#   bias:   (dim_model,)
#   x:      (..., vocabulary_size)
# ----------------------------------------------------------------------------
def embedding_forward(x, weight, bias, *, mxu_dtype=jnp.bfloat16,
                      tile_m=512, tile_n=512, tile_k=512):
    dim_model, vocab = weight.shape
    lead = x.shape[:-1]
    x2 = x.reshape(-1, vocab).astype(jnp.float32)
    m, k_dim, n_dim = x2.shape[0], vocab, dim_model

    # Layout plumbing outside the kernel: (in, out) weight -> no in-kernel .T.
    w_t = weight.T.astype(jnp.float32)                 # (vocab, dim_model)
    b2 = bias.reshape(1, n_dim).astype(jnp.float32)

    # (8,128)-aligned, lane-dense tiles.
    tk = min(tile_k, _round_up(k_dim, 128))
    tn = min(tile_n, _round_up(n_dim, 128))
    tm = min(tile_m, _round_up(m, 8))
    m_pad = _round_up(m, tm)
    k_pad = _round_up(k_dim, tk)
    n_pad = _round_up(n_dim, tn)

    if (m_pad, k_pad) != x2.shape:
        x2 = jnp.pad(x2, ((0, m_pad - m), (0, k_pad - k_dim)))
    if (k_pad, n_pad) != w_t.shape:
        w_t = jnp.pad(w_t, ((0, k_pad - k_dim), (0, n_pad - n_dim)))
    if n_pad != n_dim:
        b2 = jnp.pad(b2, ((0, 0), (0, n_pad - n_dim)))

    grid = (m_pad // tm, n_pad // tn, k_pad // tk)
    kern = functools.partial(_linear_kernel, n_k=grid[2], mxu_dtype=mxu_dtype)

    out = pl.pallas_call(
        kern,
        out_shape=jax.ShapeDtypeStruct((m_pad, n_pad), jnp.float32),
        grid_spec=pltpu.PrefetchScalarGridSpec(
            num_scalar_prefetch=0,
            grid=grid,
            in_specs=[
                pl.BlockSpec((tm, tk), lambda i, j, k: (i, k)),   # activations
                pl.BlockSpec((tk, tn), lambda i, j, k: (k, j)),   # weight (in,out)
                pl.BlockSpec((1, tn), lambda i, j, k: (0, j)),    # bias
            ],
            out_specs=pl.BlockSpec((tm, tn), lambda i, j, k: (i, j)),
            scratch_shapes=[pltpu.VMEM((tm, tn), jnp.float32)],
        ),
        compiler_params=pltpu.CompilerParams(
            dimension_semantics=("parallel", "parallel", "arbitrary"),
            vmem_limit_bytes=64 << 20,
        ),
    )(x2, w_t, b2)

    return out[:m, :n_dim].reshape(*lead, n_dim)


if __name__ == "__main__":
    # Small shapes consistent with the module's forward (lane-friendly dims).
    vocabulary_size = 256
    dim_model = 128
    batch, seq = 2, 8

    key = jax.random.PRNGKey(0)
    kx, kw, kb = jax.random.split(key, 3)

    # PyTorch nn.Linear default init: U(-1/sqrt(fan_in), 1/sqrt(fan_in)).
    bound = 1.0 / (vocabulary_size ** 0.5)
    weight = jax.random.uniform(kw, (dim_model, vocabulary_size), jnp.float32,
                                minval=-bound, maxval=bound)
    bias = jax.random.uniform(kb, (dim_model,), jnp.float32,
                              minval=-bound, maxval=bound)
    x = jax.random.normal(kx, (batch, seq, vocabulary_size), jnp.float32)

    # Perf path: bf16 MXU operands, f32 accumulation.
    y_bf16 = jax.block_until_ready(
        embedding_forward(x, weight, bias, mxu_dtype=jnp.bfloat16))
    # Exactness path: f32 MXU operands.
    y_f32 = jax.block_until_ready(
        embedding_forward(x, weight, bias, mxu_dtype=jnp.float32))

    ref = jnp.einsum("bsv,dv->bsd", x, weight,
                     precision=jax.lax.Precision.HIGHEST) + bias

    assert y_bf16.shape == (batch, seq, dim_model), y_bf16.shape
    assert y_f32.shape == (batch, seq, dim_model), y_f32.shape
    assert bool(jnp.all(jnp.isfinite(y_bf16)))
    assert bool(jnp.allclose(y_f32, ref, rtol=2e-3, atol=2e-3)), \
        float(jnp.max(jnp.abs(y_f32 - ref)))
    assert bool(jnp.allclose(y_bf16, ref, rtol=5e-2, atol=5e-2)), \
        float(jnp.max(jnp.abs(y_bf16 - ref)))
    print("KERNEL_OK")
</pallas_src>

<mosaic_0001>
module attributes {stable_mosaic.version = 11 : i64} {
  func.func @_linear_kernel(%arg0: i32, %arg1: i32, %arg2: i32, %arg3: memref<16x256xf32, #tpu.memory_space<vmem>>, %arg4: memref<256x128xf32, #tpu.memory_space<vmem>>, %arg5: memref<1x128xf32, #tpu.memory_space<vmem>>, %arg6: memref<16x128xf32, #tpu.memory_space<vmem>>, %arg7: memref<16x128xf32, #tpu.memory_space<vmem>>) attributes {dimension_semantics = [#tpu.dimension_semantics<parallel>, #tpu.dimension_semantics<parallel>, #tpu.dimension_semantics<arbitrary>], iteration_bounds = array<i64: 1, 1, 1>, scalar_prefetch = 0 : i64, scratch_operands = 1 : i64, tpu.core_type = #tpu.core_type<tc>, window_params = [{transform_indices = @transform_0, window_bounds = array<i64: 16, 256>}, {transform_indices = @transform_1, window_bounds = array<i64: 256, 128>}, {transform_indices = @transform_2, window_bounds = array<i64: 1, 128>}, {transform_indices = @transform_3, window_bounds = array<i64: 16, 128>}]} {
    %c0_i32 = arith.constant 0 : i32
    %0 = arith.cmpi eq, %arg2, %c0_i32 : i32
    %1 = arith.extui %0 : i1 to i32
    %c0_i32_0 = arith.constant 0 : i32
    %2 = arith.cmpi ne, %1, %c0_i32_0 : i32
    scf.if %2 {
      %cst_10 = arith.constant 0.000000e+00 : f32
      %14 = vector.broadcast %cst_10 : f32 to vector<16x128xf32>
      %c0_11 = arith.constant 0 : index
      %c0_12 = arith.constant 0 : index
      %15 = vector.load %arg7[%c0_11, %c0_12] : memref<16x128xf32, #tpu.memory_space<vmem>>, vector<16x128xf32>
      tpu.vector_store %arg7[%c0_11, %c0_12], %14 {strides = array<i32>} : memref<16x128xf32, #tpu.memory_space<vmem>>, vector<16x128xf32>,
    } else {
    }
    %c0 = arith.constant 0 : index
    %c0_1 = arith.constant 0 : index
    %3 = vector.load %arg7[%c0, %c0_1] : memref<16x128xf32, #tpu.memory_space<vmem>>, vector<16x128xf32>
    %c0_2 = arith.constant 0 : index
    %c0_3 = arith.constant 0 : index
    %4 = vector.load %arg3[%c0_2, %c0_3] : memref<16x256xf32, #tpu.memory_space<vmem>>, vector<16x256xf32>
    %5 = arith.truncf %4 : vector<16x256xf32> to vector<16x256xbf16>
    %c0_4 = arith.constant 0 : index
    %c0_5 = arith.constant 0 : index
    %6 = vector.load %arg4[%c0_4, %c0_5] : memref<256x128xf32, #tpu.memory_space<vmem>>, vector<256x128xf32>
    %7 = arith.truncf %6 : vector<256x128xf32> to vector<256x128xbf16>
    %cst = arith.constant dense<0.000000e+00> : vector<16x128xf32>
    %8 = tpu.matmul %5, %7, %cst {dimension_numbers = #tpu.dot_dimension_numbers<[1], [0], [0], [1], [0, 0, 1, 1], [], []>} : vector<16x256xbf16>, vector<256x128xbf16>, vector<16x128xf32> -> vector<16x128xf32>
    %9 = arith.addf %3, %8 : vector<16x128xf32>
    %c0_6 = arith.constant 0 : index
    %c0_7 = arith.constant 0 : index
    %10 = vector.load %arg7[%c0_6, %c0_7] : memref<16x128xf32, #tpu.memory_space<vmem>>, vector<16x128xf32>
    tpu.vector_store %arg7[%c0_6, %c0_7], %9 {strides = array<i32>} : memref<16x128xf32, #tpu.memory_space<vmem>>, vector<16x128xf32>,
    %c0_i32_8 = arith.constant 0 : i32
    %11 = arith.cmpi eq, %arg2, %c0_i32_8 : i32
    %12 = arith.extui %11 : i1 to i32
    %c0_i32_9 = arith.constant 0 : i32
    %13 = arith.cmpi ne, %12, %c0_i32_9 : i32
    scf.if %13 {
      %c0_10 = arith.constant 0 : index
      %c0_11 = arith.constant 0 : index
      %14 = vector.load %arg7[%c0_10, %c0_11] : memref<16x128xf32, #tpu.memory_space<vmem>>, vector<16x128xf32>
      %c0_12 = arith.constant 0 : index
      %c0_13 = arith.constant 0 : index
      %15 = vector.load %arg5[%c0_12, %c0_13] : memref<1x128xf32, #tpu.memory_space<vmem>>, vector<1x128xf32>
      %16 = vector.broadcast %15 : vector<1x128xf32> to vector<16x128xf32>
      %17 = arith.addf %14, %16 : vector<16x128xf32>
      %c0_14 = arith.constant 0 : index
      %c0_15 = arith.constant 0 : index
      %18 = vector.load %arg6[%c0_14, %c0_15] : memref<16x128xf32, #tpu.memory_space<vmem>>, vector<16x128xf32>
      tpu.vector_store %arg6[%c0_14, %c0_15], %17 {strides = array<i32>} : memref<16x128xf32, #tpu.memory_space<vmem>>, vector<16x128xf32>,
    } else {
    }
    return
  }
  func.func @transform_0(%arg0: i32, %arg1: i32, %arg2: i32) -> (i32, i32) {
    %c0_i32 = arith.constant 0 : i32
    return %arg0, %arg2 : i32, i32
  }
  func.func @transform_1(%arg0: i32, %arg1: i32, %arg2: i32) -> (i32, i32) {
    %c0_i32 = arith.constant 0 : i32
    return %arg2, %arg1 : i32, i32
  }
  func.func @transform_2(%arg0: i32, %arg1: i32, %arg2: i32) -> (i32, i32) {
    %c0_i32 = arith.constant 0 : i32
    %c0_i32_0 = arith.constant 0 : i32
    return %c0_i32, %arg1 : i32, i32
  }
  func.func @transform_3(%arg0: i32, %arg1: i32, %arg2: i32) -> (i32, i32) {
    %c0_i32 = arith.constant 0 : i32
    return %arg0, %arg1 : i32, i32
  }
}

</mosaic_0001>

<llo_original>
// kernel: tpu_custom_call.1
$region0: #{tpu_custom_call.1}
  #allocation0 [shape = 'u32[]', space=smem, size = 0x4, offset = 0x4, fixed_abs, tag = 'smem constant byte address 0x4 - core index']
  #allocation1 [shape = 'u32[72,128]{1,0:T(1,128)}', space=vmem, size = 0x9000, scoped, tag = 'internal scratch']
  #allocation2 [shape = 'f32[16,128]{1,0:T(8,128)}', space=vmem, size = 0x2000, scoped, tag = 'scratch operand']
  %s0 = inlined_call_operand.hbm [shape: f32[16,256], index: 0, kind: input, shape index: {}]
  %s1 = inlined_call_operand.hbm [shape: f32[256,128], index: 1, kind: input, shape index: {}]
  %s2 = inlined_call_operand.vmem [shape: f32[1,128], index: 2, kind: input, shape index: {}]
  %s3 = inlined_call_operand.hbm [shape: f32[16,128], index: 3, kind: output, shape index: {}]
  %s4 = sld [smem:[#allocation0]]
  $region38: #{tpu_custom_call.1} parent=0
    _
  %s6 = ssub.s32 1, %s4
  %s7 = scalar_select 0, %s6, %s4
  $region1: #{tpu_custom_call.1} parent=0
    #allocation3 [shape = 'u8[16384]{0}', space=vmem, size = 0x4000, scoped, tag = 'input window, operand 0, single buffered']
    #allocation4 [shape = 's32[1]{0}', space=sflag, size = 0x4, scoped, tag = 'scoped memory for tpu_custom_call.1']
    #allocation5 [shape = 's32[1]{0}', space=sflag, size = 0x4, scoped, tag = 'scoped memory for tpu_custom_call.1']
    #allocation6 [shape = 'u8[131072]{0}', space=vmem, size = 0x20000, scoped, tag = 'input window, operand 1, single buffered']
    #allocation7 [shape = 's32[1]{0}', space=sflag, size = 0x4, scoped, tag = 'scoped memory for tpu_custom_call.1']
    #allocation8 [shape = 'u8[8192]{0}', space=vmem, size = 0x2000, scoped, tag = 'output window, operand 0, single buffered']
    %8 = vsyncpa [#allocation4], 0
    %9 = vsyncpa [#allocation7], 0
    %10 = vsyncpa [#allocation5], 0
    // Predicated region
    $region2: #{tpu_custom_call.1} parent=1 // pred_check
      _
    $region3: #{tpu_custom_call.1} parent=1 // pred_check_branch
      %12 = sbr.rel (0) target = $region5
    $region4: #{tpu_custom_call.1} parent=1 // pred_region
      %14 = vsyncadd [#allocation4], 0
      %s15 = sshll.u32 %s0, 4
      %s16 = int_to_ptr.hbm [resolvable:$true] %s15
      %s17 = sshll.u32 [#allocation3], 4
      %s18 = int_to_ptr.vmem [resolvable:$true] %s17
      %23 = dma.hbm_to_vmem [thread:$0]  %s16, 512, %s18, [#allocation4], 256, 256, 16
    $region5: #{tpu_custom_call.1} parent=1 // pred_fallthru
      _
    // Predicated region
    $region6: #{tpu_custom_call.1} parent=1 // pred_check
      _
    $region7: #{tpu_custom_call.1} parent=1 // pred_check_branch
      %25 = sbr.rel (0) target = $region9
    $region8: #{tpu_custom_call.1} parent=1 // pred_region
      %27 = vsyncadd [#allocation7], 0
      %s28 = sshll.u32 %s1, 4
      %s29 = int_to_ptr.hbm [resolvable:$true] %s28
      %s30 = sshll.u32 [#allocation6], 4
      %s31 = int_to_ptr.vmem [resolvable:$true] %s30
      %36 = dma.hbm_to_vmem [thread:$0]  %s29, 4096, %s31, [#allocation7], 128, 128, 8
    $region9: #{tpu_custom_call.1} parent=1 // pred_fallthru
      _
    // Predicated region
    $region10: #{tpu_custom_call.1} parent=1 // pred_check
      _
    $region11: #{tpu_custom_call.1} parent=1 // pred_check_branch
      %38 = sbr.rel (0) target = $region13
    $region12: #{tpu_custom_call.1} parent=1 // pred_region
      _
    $region13: #{tpu_custom_call.1} parent=1 // pred_fallthru
      _
    // Predicated region
    $region14: #{tpu_custom_call.1} parent=1 // pred_check
      _
    $region15: #{tpu_custom_call.1} parent=1 // pred_check_branch
      %40 = sbr.rel (0) target = $region17
    $region16: #{tpu_custom_call.1} parent=1 // pred_region
      %42 = dma.done [#allocation4], 512
    $region17: #{tpu_custom_call.1} parent=1 // pred_fallthru
      _
    // Predicated region
    $region18: #{tpu_custom_call.1} parent=1 // pred_check
      _
    $region19: #{tpu_custom_call.1} parent=1 // pred_check_branch
      %44 = sbr.rel (0) target = $region21
    $region20: #{tpu_custom_call.1} parent=1 // pred_region
      %46 = dma.done [#allocation7], 4096
    $region21: #{tpu_custom_call.1} parent=1 // pred_fallthru
      _
    %p47 = scmp.eq.s32.totalorder 0, 0
    // Predicated region
    $region22: #{tpu_custom_call.1} parent=1 // pred_check
      %p48 = pneg %p47
    $region23: #{tpu_custom_call.1} parent=1 // pred_check_branch
      %50 = sbr.rel (%p48) target = $region25
    $region24: #{tpu_custom_call.1} parent=1 // pred_region
      %51 = vst [vmem:[#allocation2] sm:$0xff] 0.0
      %52 = vst [vmem:[#allocation2 + $0x8] sm:$0xff] 0.0
    $region25: #{tpu_custom_call.1} parent=1 // pred_fallthru
      _
    %v53 = vld [vmem:[#allocation2] sm:$0xff]
    %v54 = vld [vmem:[#allocation2 + $0x8] sm:$0xff]
    %v55 = vld [vmem:[#allocation3] sm:$0xff]
    %v56 = vld [vmem:[#allocation3 + $0x8] sm:$0xff]
    %v57 = vld [vmem:[#allocation3 + $0x10] sm:$0xff]
    %v58 = vld [vmem:[#allocation3 + $0x18] sm:$0xff]
    %v59 = vpack.c.bf16 %v57, %v55
    %v60 = vpack.c.bf16 %v58, %v56
    %v61 = vld [vmem:[#allocation6] sm:$0xff]
    %v62 = vld [vmem:[#allocation6 + $0x8] sm:$0xff]
    %v63 = vld [vmem:[#allocation6 + $0x10] sm:$0xff]
    %v64 = vld [vmem:[#allocation6 + $0x18] sm:$0xff]
    %v65 = vld [vmem:[#allocation6 + $0x20] sm:$0xff]
    %v66 = vld [vmem:[#allocation6 + $0x28] sm:$0xff]
    %v67 = vld [vmem:[#allocation6 + $0x30] sm:$0xff]
    %v68 = vld [vmem:[#allocation6 + $0x38] sm:$0xff]
    %v69 = vld [vmem:[#allocation6 + $0x40] sm:$0xff]
    %v70 = vld [vmem:[#allocation6 + $0x48] sm:$0xff]
    %v71 = vld [vmem:[#allocation6 + $0x50] sm:$0xff]
    %v72 = vld [vmem:[#allocation6 + $0x58] sm:$0xff]
    %v73 = vld [vmem:[#allocation6 + $0x60] sm:$0xff]
    %v74 = vld [vmem:[#allocation6 + $0x68] sm:$0xff]
    %v75 = vld [vmem:[#allocation6 + $0x70] sm:$0xff]
    %v76 = vld [vmem:[#allocation6 + $0x78] sm:$0xff]
    %v77 = vld [vmem:[#allocation6 + $0x80] sm:$0xff]
    %v78 = vld [vmem:[#allocation6 + $0x88] sm:$0xff]
    %v79 = vld [vmem:[#allocation6 + $0x90] sm:$0xff]
    %v80 = vld [vmem:[#allocation6 + $0x98] sm:$0xff]
    %v81 = vld [vmem:[#allocation6 + $0xa0] sm:$0xff]
    %v82 = vld [vmem:[#allocation6 + $0xa8] sm:$0xff]
    %v83 = vld [vmem:[#allocation6 + $0xb0] sm:$0xff]
    %v84 = vld [vmem:[#allocation6 + $0xb8] sm:$0xff]
    %v85 = vld [vmem:[#allocation6 + $0xc0] sm:$0xff]
    %v86 = vld [vmem:[#allocation6 + $0xc8] sm:$0xff]
    %v87 = vld [vmem:[#allocation6 + $0xd0] sm:$0xff]
    %v88 = vld [vmem:[#allocation6 + $0xd8] sm:$0xff]
    %v89 = vld [vmem:[#allocation6 + $0xe0] sm:$0xff]
    %v90 = vld [vmem:[#allocation6 + $0xe8] sm:$0xff]
    %v91 = vld [vmem:[#allocation6 + $0xf0] sm:$0xff]
    %v92 = vld [vmem:[#allocation6 + $0xf8] sm:$0xff]
    %v93 = vpack.c.bf16 %v62, %v61
    %v94 = vpack.c.bf16 %v64, %v63
    %v95 = vpack.c.bf16 %v66, %v65
    %v96 = vpack.c.bf16 %v68, %v67
    %v97 = vpack.c.bf16 %v70, %v69
    %v98 = vpack.c.bf16 %v72, %v71
    %v99 = vpack.c.bf16 %v74, %v73
    %v100 = vpack.c.bf16 %v76, %v75
    %v101 = vpack.c.bf16 %v78, %v77
    %v102 = vpack.c.bf16 %v80, %v79
    %v103 = vpack.c.bf16 %v82, %v81
    %v104 = vpack.c.bf16 %v84, %v83
    %v105 = vpack.c.bf16 %v86, %v85
    %v106 = vpack.c.bf16 %v88, %v87
    %v107 = vpack.c.bf16 %v90, %v89
    %v108 = vpack.c.bf16 %v92, %v91
    %109 = vmatpush.bf16.msra.mxu0 %v100
    %110 = vmatpush.bf16.msra.mxu0 %v99
    %111 = vmatpush.bf16.msra.mxu0 %v98
    %112 = vmatpush.bf16.msra.mxu0 %v97
    %113 = vmatpush.bf16.msra.mxu0 %v96
    %114 = vmatpush.bf16.msra.mxu0 %v95
    %115 = vmatpush.bf16.msra.mxu0 %v94
    %116 = vmatpush.bf16.msra.mxu0 %v93
    %117 = vmatmul.bf16.gmra.mxu0 %v59
    %v118 = vpop.f32.mrf.mxu0
    %v119 = vadd.f32 0.0, %v118
    %v120 = vpop.f32.mrf.mxu0
    %v121 = vadd.f32 0.0, %v120
    %122 = vdwg.mxu0
    %123 = vmatpush.bf16.msra.mxu0 %v108
    %124 = vmatpush.bf16.msra.mxu0 %v107
    %125 = vmatpush.bf16.msra.mxu0 %v106
    %126 = vmatpush.bf16.msra.mxu0 %v105
    %127 = vmatpush.bf16.msra.mxu0 %v104
    %128 = vmatpush.bf16.msra.mxu0 %v103
    %129 = vmatpush.bf16.msra.mxu0 %v102
    %130 = vmatpush.bf16.msra.mxu0 %v101
    %131 = vmatmul.bf16.gmra.mxu0 %v60
    %v132 = vpop.f32.mrf.mxu0
    %v133 = vadd.f32 %v119, %v132
    %v134 = vpop.f32.mrf.mxu0
    %v135 = vadd.f32 %v121, %v134
    %136 = vdwg.mxu0
    %v137 = vadd.f32 %v53, %v133
    %v138 = vadd.f32 %v54, %v135
    %139 = vst [vmem:[#allocation2] sm:$0xff] %v137
    %140 = vst [vmem:[#allocation2 + $0x8] sm:$0xff] %v138
    // Predicated region
    $region26: #{tpu_custom_call.1} parent=1 // pred_check
      %p141 = pneg %p47
    $region27: #{tpu_custom_call.1} parent=1 // pred_check_branch
      %143 = sbr.rel (%p141) target = $region29
    $region28: #{tpu_custom_call.1} parent=1 // pred_region
      %v144 = vld [vmem:[#allocation2] sm:$0xff]
      %v145 = vld [vmem:[#allocation2 + $0x8] sm:$0xff]
      %v146 = vld [vmem:[%s2] sm:$0x1]
      %v148 = vperm.slane %v146, 0
      %v150 = vadd.f32 %v144, %v148
      %v151 = vadd.f32 %v145, %v148
      %152 = vst [vmem:[#allocation8] sm:$0xff] %v150
      %153 = vst [vmem:[#allocation8 + $0x8] sm:$0xff] %v151
    $region29: #{tpu_custom_call.1} parent=1 // pred_fallthru
      _
    // Predicated region
    $region30: #{tpu_custom_call.1} parent=1 // pred_check
      _
    $region31: #{tpu_custom_call.1} parent=1 // pred_check_branch
      %155 = sbr.rel (0) target = $region33
    $region32: #{tpu_custom_call.1} parent=1 // pred_region
      %157 = vsyncadd [#allocation5], 0
      %s158 = sshll.u32 [#allocation8], 4
      %s159 = int_to_ptr.vmem [resolvable:$true] %s158
      %s160 = sshll.u32 %s3, 4
      %s161 = int_to_ptr.hbm [resolvable:$true] %s160
      %166 = dma.vmem_to_hbm [thread:$0]  %s159, 256, %s161, [#allocation5], 128, 128, 8
    $region33: #{tpu_custom_call.1} parent=1 // pred_fallthru
      _
    // Predicated region
    $region34: #{tpu_custom_call.1} parent=1 // pred_check
      _
    $region35: #{tpu_custom_call.1} parent=1 // pred_check_branch
      %168 = sbr.rel (0) target = $region37
    $region36: #{tpu_custom_call.1} parent=1 // pred_region
      %170 = dma.done [#allocation5], 256
    $region37: #{tpu_custom_call.1} parent=1 // pred_fallthru
      _
    %171 = vsyncpa [#allocation4], 1
    %172 = vsyncpa [#allocation7], 1
    %173 = vsyncpa [#allocation5], 1

</llo_original>
